<compile_context>
chip_gen: v7x
topology: tpu7x:2x2x1
jax: 0.10.0
libtpu: 0.0.40
codegen_flags: <defaults>
</compile_context>

<pallas_src>
import numpy as np
import jax
import jax.numpy as jnp
from jax.experimental import pallas as pl
from jax.experimental.pallas import tpu as pltpu

BN_EPS = 1e-5  # PyTorch BatchNorm2d default eps
# 3x3 tap offsets in OIHW row-major order: t = ki*3 + kj, offset = k - 1
OFFSETS = [(oi, oj) for oi in (-1, 0, 1) for oj in (-1, 0, 1)]


def _tap_masks(H, W):
    """(9, H*W) 0/1 masks: mask[t, i*W+j] == 1 iff (i+oi, j+oj) is inside the image."""
    m = np.zeros((9, H * W), np.float32)
    for t, (oi, oj) in enumerate(OFFSETS):
        valid = np.zeros((H, W), np.float32)
        valid[max(0, -oi):min(H, H - oi), max(0, -oj):min(W, W - oj)] = 1.0
        m[t] = valid.reshape(-1)
    return m


def same_conv_forward(x, w, gamma, beta):
    """Pallas forward of same_conv. x: (N, Cin, H, W) f32, w: (Cout, Cin, 3, 3)."""
    N, Cin, H, W = x.shape
    Cout = w.shape[0]
    HW = H * W

    # Host-side prep (free / parameter-sized): lane-dense activations, tap-major
    # weight matrix (hoists all per-tap weight slicing out of the kernel), masks.
    xf = x.astype(jnp.float32).reshape(N, Cin, HW)
    w2 = jnp.asarray(w, jnp.float32).transpose(0, 2, 3, 1).reshape(Cout, 9 * Cin)
    masks = jnp.asarray(_tap_masks(H, W))

    def conv_kernel(x_ref, w_ref, mask_ref, yconv_ref, stats_ref, patches_ref):
        xb = x_ref[0]                                        # (Cin, HW) lane-dense
        # im2col: lane rolls (XLU) + static 0/1 edge masks; rows ordered t*Cin + c.
        for t, (oi, oj) in enumerate(OFFSETS):
            shift = (-(oi * W + oj)) % HW
            rolled = xb if shift == 0 else pltpu.roll(xb, shift, axis=1)
            patches_ref[t * Cin:(t + 1) * Cin, :] = rolled * mask_ref[t:t + 1, :]
        # One MXU matmul performs the whole 3x3 conv for this batch element.
        yc = jnp.dot(w_ref[...], patches_ref[...],
                     preferred_element_type=jnp.float32)     # (Cout, HW)
        yconv_ref[0] = yc
        # Single-pass BN partial stats (sum, sum of squares) per channel.
        stats_ref[0, :, 0:1] = jnp.sum(yc, axis=1, keepdims=True)
        stats_ref[0, :, 1:2] = jnp.sum(yc * yc, axis=1, keepdims=True)

    yconv, stats = pl.pallas_call(
        conv_kernel,
        out_shape=(jax.ShapeDtypeStruct((N, Cout, HW), jnp.float32),
                   jax.ShapeDtypeStruct((N, Cout, 2), jnp.float32)),
        grid=(N,),
        in_specs=[pl.BlockSpec((1, Cin, HW), lambda n: (n, 0, 0)),
                  pl.BlockSpec((Cout, 9 * Cin), lambda n: (0, 0)),
                  pl.BlockSpec((9, HW), lambda n: (0, 0))],
        out_specs=(pl.BlockSpec((1, Cout, HW), lambda n: (n, 0, 0)),
                   pl.BlockSpec((1, Cout, 2), lambda n: (n, 0, 0))),
        scratch_shapes=[pltpu.VMEM((9 * Cin, HW), jnp.float32)],
        compiler_params=pltpu.CompilerParams(dimension_semantics=("parallel",)),
    )(xf, w2, masks)

    # Fold batch statistics (Cout-sized scalar math) into one scale/shift per channel.
    # TODO(synk): running_mean/running_var momentum update is a training-time buffer
    # side effect, not part of the returned tensor; omitted.
    cnt = jnp.float32(N * HW)
    s = jnp.sum(stats, axis=0)                               # (Cout, 2)
    mean = s[:, 0] / cnt
    var = s[:, 1] / cnt - mean * mean                        # biased batch variance
    scale = gamma.astype(jnp.float32) * jax.lax.rsqrt(var + BN_EPS)
    shift = beta.astype(jnp.float32) - mean * scale

    def bn_relu_kernel(y_ref, sc_ref, sh_ref, o_ref):
        o_ref[0] = jnp.maximum(y_ref[0] * sc_ref[...] + sh_ref[...], 0.0)

    y = pl.pallas_call(
        bn_relu_kernel,
        out_shape=jax.ShapeDtypeStruct((N, Cout, HW), jnp.float32),
        grid=(N,),
        in_specs=[pl.BlockSpec((1, Cout, HW), lambda n: (n, 0, 0)),
                  pl.BlockSpec((Cout, 1), lambda n: (0, 0)),
                  pl.BlockSpec((Cout, 1), lambda n: (0, 0))],
        out_specs=pl.BlockSpec((1, Cout, HW), lambda n: (n, 0, 0)),
        compiler_params=pltpu.CompilerParams(dimension_semantics=("parallel",)),
    )(yconv, scale.reshape(Cout, 1), shift.reshape(Cout, 1))

    return y.reshape(N, Cout, H, W)


def same_conv_reference(x, w, gamma, beta):
    """Pure-JAX reference (same math) for the correctness check."""
    y = jax.lax.conv_general_dilated(
        x.astype(jnp.float32), w.astype(jnp.float32),
        window_strides=(1, 1), padding=((1, 1), (1, 1)),
        dimension_numbers=('NCHW', 'OIHW', 'NCHW'),
        precision=jax.lax.Precision.HIGHEST)
    mean = y.mean(axis=(0, 2, 3), keepdims=True)
    var = ((y - mean) ** 2).mean(axis=(0, 2, 3), keepdims=True)
    yn = (y - mean) * jax.lax.rsqrt(var + BN_EPS) * gamma[None, :, None, None] \
        + beta[None, :, None, None]
    return jnp.maximum(yn, 0.0)


if __name__ == "__main__":
    key = jax.random.PRNGKey(0)
    kx, kw, kg, kb = jax.random.split(key, 4)

    N, Cin, Cout, H, W = 2, 4, 8, 16, 16
    x = jax.random.normal(kx, (N, Cin, H, W), jnp.float32)
    w = 0.1 * jax.random.normal(kw, (Cout, Cin, 3, 3), jnp.float32)
    gamma = 1.0 + 0.1 * jax.random.normal(kg, (Cout,), jnp.float32)
    beta = 0.1 * jax.random.normal(kb, (Cout,), jnp.float32)

    y = same_conv_forward(x, w, gamma, beta)
    y = jax.block_until_ready(y)

    y_ref = same_conv_reference(x, w, gamma, beta)
    assert y.shape == (N, Cout, H, W), y.shape
    err = float(jnp.max(jnp.abs(y - y_ref)))
    assert err < 2e-3, f"max abs err {err}"
    print("KERNEL_OK")
</pallas_src>

<mosaic_0001>
module attributes {stable_mosaic.version = 11 : i64} {
  func.func @conv_kernel(%arg0: i32, %arg1: memref<1x4x256xf32, #tpu.memory_space<vmem>>, %arg2: memref<8x36xf32, #tpu.memory_space<vmem>>, %arg3: memref<9x256xf32, #tpu.memory_space<vmem>>, %arg4: memref<1x8x256xf32, #tpu.memory_space<vmem>>, %arg5: memref<1x8x2xf32, #tpu.memory_space<vmem>>, %arg6: memref<36x256xf32, #tpu.memory_space<vmem>>) attributes {dimension_semantics = [#tpu.dimension_semantics<parallel>], iteration_bounds = array<i64: 2>, scalar_prefetch = 0 : i64, scratch_operands = 1 : i64, tpu.core_type = #tpu.core_type<tc>, window_params = [{transform_indices = @transform_0, window_bounds = array<i64: 1, 4, 256>}, {pipeline_mode = #tpu.pipeline_mode<synchronous>, transform_indices = @transform_1, window_bounds = array<i64: 8, 36>}, {pipeline_mode = #tpu.pipeline_mode<synchronous>, transform_indices = @transform_2, window_bounds = array<i64: 9, 256>}, {transform_indices = @transform_3, window_bounds = array<i64: 1, 8, 256>}, {transform_indices = @transform_4, window_bounds = array<i64: 1, 8, 2>}]} {
    %c0 = arith.constant 0 : index
    %c0_0 = arith.constant 0 : index
    %c0_1 = arith.constant 0 : index
    %0 = vector.load %arg1[%c0, %c0_0, %c0_1] : memref<1x4x256xf32, #tpu.memory_space<vmem>>, vector<1x4x256xf32>
    %1 = vector.shape_cast %0 : vector<1x4x256xf32> to vector<4x256xf32>
    %c17_i32 = arith.constant 17 : i32
    %2 = tpu.dynamic_rotate %1 by %c17_i32 dim 1 : vector<4x256xf32>, i32 -> vector<4x256xf32>
    %c0_2 = arith.constant 0 : index
    %c0_3 = arith.constant 0 : index
    %3 = vector.load %arg3[%c0_2, %c0_3] : memref<9x256xf32, #tpu.memory_space<vmem>>, vector<1x256xf32>
    %4 = vector.broadcast %3 : vector<1x256xf32> to vector<4x256xf32>
    %5 = arith.mulf %2, %4 : vector<4x256xf32>
    %c0_4 = arith.constant 0 : index
    %c0_5 = arith.constant 0 : index
    %6 = vector.load %arg6[%c0_4, %c0_5] : memref<36x256xf32, #tpu.memory_space<vmem>>, vector<4x256xf32>
    tpu.vector_store %arg6[%c0_4, %c0_5], %5 {strides = array<i32>} : memref<36x256xf32, #tpu.memory_space<vmem>>, vector<4x256xf32>,
    %c16_i32 = arith.constant 16 : i32
    %7 = tpu.dynamic_rotate %1 by %c16_i32 dim 1 : vector<4x256xf32>, i32 -> vector<4x256xf32>
    %c1 = arith.constant 1 : index
    %c0_6 = arith.constant 0 : index
    %8 = vector.load %arg3[%c1, %c0_6] : memref<9x256xf32, #tpu.memory_space<vmem>>, vector<1x256xf32>
    %9 = vector.broadcast %8 : vector<1x256xf32> to vector<4x256xf32>
    %10 = arith.mulf %7, %9 : vector<4x256xf32>
    %c4 = arith.constant 4 : index
    %c0_7 = arith.constant 0 : index
    %11 = vector.load %arg6[%c4, %c0_7] : memref<36x256xf32, #tpu.memory_space<vmem>>, vector<4x256xf32>
    tpu.vector_store %arg6[%c4, %c0_7], %10 {strides = array<i32>} : memref<36x256xf32, #tpu.memory_space<vmem>>, vector<4x256xf32>,
    %c15_i32 = arith.constant 15 : i32
    %12 = tpu.dynamic_rotate %1 by %c15_i32 dim 1 : vector<4x256xf32>, i32 -> vector<4x256xf32>
    %c2 = arith.constant 2 : index
    %c0_8 = arith.constant 0 : index
    %13 = vector.load %arg3[%c2, %c0_8] : memref<9x256xf32, #tpu.memory_space<vmem>>, vector<1x256xf32>
    %14 = vector.broadcast %13 : vector<1x256xf32> to vector<4x256xf32>
    %15 = arith.mulf %12, %14 : vector<4x256xf32>
    %c8 = arith.constant 8 : index
    %c0_9 = arith.constant 0 : index
    %16 = vector.load %arg6[%c8, %c0_9] : memref<36x256xf32, #tpu.memory_space<vmem>>, vector<4x256xf32>
    tpu.vector_store %arg6[%c8, %c0_9], %15 {strides = array<i32>} : memref<36x256xf32, #tpu.memory_space<vmem>>, vector<4x256xf32>,
    %c1_i32 = arith.constant 1 : i32
    %17 = tpu.dynamic_rotate %1 by %c1_i32 dim 1 : vector<4x256xf32>, i32 -> vector<4x256xf32>
    %c3 = arith.constant 3 : index
    %c0_10 = arith.constant 0 : index
    %18 = vector.load %arg3[%c3, %c0_10] : memref<9x256xf32, #tpu.memory_space<vmem>>, vector<1x256xf32>
    %19 = vector.broadcast %18 : vector<1x256xf32> to vector<4x256xf32>
    %20 = arith.mulf %17, %19 : vector<4x256xf32>
    %c12 = arith.constant 12 : index
    %c0_11 = arith.constant 0 : index
    %21 = vector.load %arg6[%c12, %c0_11] : memref<36x256xf32, #tpu.memory_space<vmem>>, vector<4x256xf32>
    tpu.vector_store %arg6[%c12, %c0_11], %20 {strides = array<i32>} : memref<36x256xf32, #tpu.memory_space<vmem>>, vector<4x256xf32>,
    %c4_12 = arith.constant 4 : index
    %c0_13 = arith.constant 0 : index
    %22 = vector.load %arg3[%c4_12, %c0_13] : memref<9x256xf32, #tpu.memory_space<vmem>>, vector<1x256xf32>
    %23 = vector.broadcast %22 : vector<1x256xf32> to vector<4x256xf32>
    %24 = arith.mulf %1, %23 : vector<4x256xf32>
    %c16 = arith.constant 16 : index
    %c0_14 = arith.constant 0 : index
    %25 = vector.load %arg6[%c16, %c0_14] : memref<36x256xf32, #tpu.memory_space<vmem>>, vector<4x256xf32>
    tpu.vector_store %arg6[%c16, %c0_14], %24 {strides = array<i32>} : memref<36x256xf32, #tpu.memory_space<vmem>>, vector<4x256xf32>,
    %c255_i32 = arith.constant 255 : i32
    %26 = tpu.dynamic_rotate %1 by %c255_i32 dim 1 : vector<4x256xf32>, i32 -> vector<4x256xf32>
    %c5 = arith.constant 5 : index
    %c0_15 = arith.constant 0 : index
    %27 = vector.load %arg3[%c5, %c0_15] : memref<9x256xf32, #tpu.memory_space<vmem>>, vector<1x256xf32>
    %28 = vector.broadcast %27 : vector<1x256xf32> to vector<4x256xf32>
    %29 = arith.mulf %26, %28 : vector<4x256xf32>
    %c20 = arith.constant 20 : index
    %c0_16 = arith.constant 0 : index
    %30 = vector.load %arg6[%c20, %c0_16] : memref<36x256xf32, #tpu.memory_space<vmem>>, vector<4x256xf32>
    tpu.vector_store %arg6[%c20, %c0_16], %29 {strides = array<i32>} : memref<36x256xf32, #tpu.memory_space<vmem>>, vector<4x256xf32>,
    %c241_i32 = arith.constant 241 : i32
    %31 = tpu.dynamic_rotate %1 by %c241_i32 dim 1 : vector<4x256xf32>, i32 -> vector<4x256xf32>
    %c6 = arith.constant 6 : index
    %c0_17 = arith.constant 0 : index
    %32 = vector.load %arg3[%c6, %c0_17] : memref<9x256xf32, #tpu.memory_space<vmem>>, vector<1x256xf32>
    %33 = vector.broadcast %32 : vector<1x256xf32> to vector<4x256xf32>
    %34 = arith.mulf %31, %33 : vector<4x256xf32>
    %c24 = arith.constant 24 : index
    %c0_18 = arith.constant 0 : index
    %35 = vector.load %arg6[%c24, %c0_18] : memref<36x256xf32, #tpu.memory_space<vmem>>, vector<4x256xf32>
    tpu.vector_store %arg6[%c24, %c0_18], %34 {strides = array<i32>} : memref<36x256xf32, #tpu.memory_space<vmem>>, vector<4x256xf32>,
    %c240_i32 = arith.constant 240 : i32
    %36 = tpu.dynamic_rotate %1 by %c240_i32 dim 1 : vector<4x256xf32>, i32 -> vector<4x256xf32>
    %c7 = arith.constant 7 : index
    %c0_19 = arith.constant 0 : index
    %37 = vector.load %arg3[%c7, %c0_19] : memref<9x256xf32, #tpu.memory_space<vmem>>, vector<1x256xf32>
    %38 = vector.broadcast %37 : vector<1x256xf32> to vector<4x256xf32>
    %39 = arith.mulf %36, %38 : vector<4x256xf32>
    %c28 = arith.constant 28 : index
    %c0_20 = arith.constant 0 : index
    %40 = vector.load %arg6[%c28, %c0_20] : memref<36x256xf32, #tpu.memory_space<vmem>>, vector<4x256xf32>
    tpu.vector_store %arg6[%c28, %c0_20], %39 {strides = array<i32>} : memref<36x256xf32, #tpu.memory_space<vmem>>, vector<4x256xf32>,
    %c239_i32 = arith.constant 239 : i32
    %41 = tpu.dynamic_rotate %1 by %c239_i32 dim 1 : vector<4x256xf32>, i32 -> vector<4x256xf32>
    %c8_21 = arith.constant 8 : index
    %c0_22 = arith.constant 0 : index
    %42 = vector.load %arg3[%c8_21, %c0_22] : memref<9x256xf32, #tpu.memory_space<vmem>>, vector<1x256xf32>
    %43 = vector.broadcast %42 : vector<1x256xf32> to vector<4x256xf32>
    %44 = arith.mulf %41, %43 : vector<4x256xf32>
    %c32 = arith.constant 32 : index
    %c0_23 = arith.constant 0 : index
    %45 = vector.load %arg6[%c32, %c0_23] : memref<36x256xf32, #tpu.memory_space<vmem>>, vector<4x256xf32>
    tpu.vector_store %arg6[%c32, %c0_23], %44 {strides = array<i32>} : memref<36x256xf32, #tpu.memory_space<vmem>>, vector<4x256xf32>,
    %c0_24 = arith.constant 0 : index
    %c0_25 = arith.constant 0 : index
    %46 = vector.load %arg2[%c0_24, %c0_25] : memref<8x36xf32, #tpu.memory_space<vmem>>, vector<8x36xf32>
    %c0_26 = arith.constant 0 : index
    %c0_27 = arith.constant 0 : index
    %47 = vector.load %arg6[%c0_26, %c0_27] : memref<36x256xf32, #tpu.memory_space<vmem>>, vector<36x256xf32>
    %cst = arith.constant dense<0.000000e+00> : vector<8x256xf32>
    %48 = tpu.matmul %46, %47, %cst {dimension_numbers = #tpu.dot_dimension_numbers<[1], [0], [0], [1], [0, 0, 1, 1], [], []>} : vector<8x36xf32>, vector<36x256xf32>, vector<8x256xf32> -> vector<8x256xf32>
    %c0_28 = arith.constant 0 : index
    %c0_29 = arith.constant 0 : index
    %c0_30 = arith.constant 0 : index
    %49 = vector.load %arg4[%c0_28, %c0_29, %c0_30] : memref<1x8x256xf32, #tpu.memory_space<vmem>>, vector<1x8x256xf32>
    %50 = vector.shape_cast %49 : vector<1x8x256xf32> to vector<8x256xf32>
    %51 = vector.shape_cast %48 : vector<8x256xf32> to vector<1x8x256xf32>
    tpu.vector_store %arg4[%c0_28, %c0_29, %c0_30], %51 {strides = array<i32>} : memref<1x8x256xf32, #tpu.memory_space<vmem>>, vector<1x8x256xf32>,
    %cst_31 = arith.constant dense<0.000000e+00> : vector<8xf32>
    %52 = vector.multi_reduction <add>, %48, %cst_31 [1] : vector<8x256xf32> to vector<8xf32>
    %53 = vector.shape_cast %52 : vector<8xf32> to vector<8x1xf32>
    %c0_32 = arith.constant 0 : index
    %c0_33 = arith.constant 0 : index
    %c0_34 = arith.constant 0 : index
    %54 = vector.load %arg5[%c0_32, %c0_33, %c0_34] : memref<1x8x2xf32, #tpu.memory_space<vmem>>, vector<1x8x1xf32>
    %55 = vector.shape_cast %54 : vector<1x8x1xf32> to vector<8x1xf32>
    %56 = vector.shape_cast %53 : vector<8x1xf32> to vector<1x8x1xf32>
    tpu.vector_store %arg5[%c0_32, %c0_33, %c0_34], %56 {strides = array<i32>} : memref<1x8x2xf32, #tpu.memory_space<vmem>>, vector<1x8x1xf32>,
    %57 = arith.mulf %48, %48 : vector<8x256xf32>
    %cst_35 = arith.constant dense<0.000000e+00> : vector<8xf32>
    %58 = vector.multi_reduction <add>, %57, %cst_35 [1] : vector<8x256xf32> to vector<8xf32>
    %59 = vector.shape_cast %58 : vector<8xf32> to vector<8x1xf32>
    %c0_36 = arith.constant 0 : index
    %c0_37 = arith.constant 0 : index
    %c1_38 = arith.constant 1 : index
    %60 = vector.load %arg5[%c0_36, %c0_37, %c1_38] : memref<1x8x2xf32, #tpu.memory_space<vmem>>, vector<1x8x1xf32>
    %61 = vector.shape_cast %60 : vector<1x8x1xf32> to vector<8x1xf32>
    %62 = vector.shape_cast %59 : vector<8x1xf32> to vector<1x8x1xf32>
    tpu.vector_store %arg5[%c0_36, %c0_37, %c1_38], %62 {strides = array<i32>} : memref<1x8x2xf32, #tpu.memory_space<vmem>>, vector<1x8x1xf32>,
    return
  }
  func.func @transform_0(%arg0: i32) -> (i32, i32, i32) {
    %c0_i32 = arith.constant 0 : i32
    %c0_i32_0 = arith.constant 0 : i32
    %c0_i32_1 = arith.constant 0 : i32
    return %arg0, %c0_i32, %c0_i32_0 : i32, i32, i32
  }
  func.func @transform_1(%arg0: i32) -> (i32, i32) {
    %c0_i32 = arith.constant 0 : i32
    %c0_i32_0 = arith.constant 0 : i32
    %c0_i32_1 = arith.constant 0 : i32
    return %c0_i32, %c0_i32_0 : i32, i32
  }
  func.func @transform_2(%arg0: i32) -> (i32, i32) {
    %c0_i32 = arith.constant 0 : i32
    %c0_i32_0 = arith.constant 0 : i32
    %c0_i32_1 = arith.constant 0 : i32
    return %c0_i32, %c0_i32_0 : i32, i32
  }
  func.func @transform_3(%arg0: i32) -> (i32, i32, i32) {
    %c0_i32 = arith.constant 0 : i32
    %c0_i32_0 = arith.constant 0 : i32
    %c0_i32_1 = arith.constant 0 : i32
    return %arg0, %c0_i32, %c0_i32_0 : i32, i32, i32
  }
  func.func @transform_4(%arg0: i32) -> (i32, i32, i32) {
    %c0_i32 = arith.constant 0 : i32
    %c0_i32_0 = arith.constant 0 : i32
    %c0_i32_1 = arith.constant 0 : i32
    return %arg0, %c0_i32, %c0_i32_0 : i32, i32, i32
  }
}

</mosaic_0001>

<llo_original>
// kernel: tpu_custom_call.1
$region0: #{tpu_custom_call.1}
  #allocation0 [shape = 'u32[]', space=smem, size = 0x4, offset = 0x4, fixed_abs, tag = 'smem constant byte address 0x4 - core index']
  #allocation1 [shape = 'u32[144,128]{1,0:T(1,128)}', space=vmem, size = 0x12000, scoped, tag = 'internal scratch']
  #allocation2 [shape = 'f32[36,256]{1,0:T(8,128)}', space=vmem, size = 0xa000, scoped, tag = 'scratch operand']
  %s0 = inlined_call_operand.hbm [shape: f32[2,4,256], index: 0, kind: input, shape index: {}]
  %s1 = inlined_call_operand.hbm [shape: f32[8,36], index: 1, kind: input, shape index: {}]
  %s2 = inlined_call_operand.hbm [shape: f32[9,256], index: 2, kind: input, shape index: {}]
  %s3 = inlined_call_operand.hbm [shape: f32[2,8,256], index: 3, kind: output, shape index: {0}]
  %s4 = inlined_call_operand.vmem [shape: f32[2,8,2], index: 4, kind: output, shape index: {1}]
  %5 = xla_tuple %s3, %s4
  %s6 = sld [smem:[#allocation0]]
  $region65: #{tpu_custom_call.1} parent=0
    _
  %s8 = ssub.s32 1, %s6
  %s9 = scalar_select 0, %s8, %s6
  $region1: #{tpu_custom_call.1} parent=0
    #allocation3 [shape = 'u8[8192]{0}', space=vmem, size = 0x2000, scoped, tag = 'input window, operand 0']
    #allocation4 [shape = 's32[2]{0}', space=sflag, size = 0x8, scoped, tag = 'scoped memory for tpu_custom_call.1']
    #allocation5 [shape = 's32[2]{0}', space=sflag, size = 0x8, scoped, tag = 'scoped memory for tpu_custom_call.1']
    #allocation6 [shape = 'u8[4096]{0}', space=vmem, size = 0x1000, scoped, tag = 'input window, operand 1, single buffered']
    #allocation7 [shape = 's32[1]{0}', space=sflag, size = 0x4, scoped, tag = 'scoped memory for tpu_custom_call.1']
    #allocation8 [shape = 'u8[16384]{0}', space=vmem, size = 0x4000, scoped, tag = 'input window, operand 2, single buffered']
    #allocation9 [shape = 'u8[16384]{0}', space=vmem, size = 0x4000, scoped, tag = 'output window, operand 0']
    %10 = vsyncpa [#allocation4], 0
    %s11 = scalar_lea.sflag [#allocation4], 1
    %12 = vsyncpa %s11, 0
    %13 = vsyncpa [#allocation7], 0
    %14 = vsyncpa [#allocation5], 0
    %s15 = scalar_lea.sflag [#allocation5], 1
    %16 = vsyncpa %s15, 0
    loop: start=0, step=1, limit=4
    $region2: #{tpu_custom_call.1} parent=1 // loop_pre_header
      _
    $region3: #{tpu_custom_call.1} parent=1 // loop_header
      %s18 = sphi 0, %s22
      %p19 = scmp.ge.s32.totalorder %s18, 4
      %s28 = sphi 0, %s30
      %s31 = sphi 0, %s28
      %s32 = sphi 0, %s31
      %s48 = sphi 0, %s32
      %s52 = sphi 0, %s52
      %s54 = sphi 0, %s52
      %s55 = sphi 0, %s54
      %s69 = sphi 0, %s55
      %s73 = sphi 0, %s73
      %s75 = sphi 0, %s73
      %s76 = sphi 0, %s75
      %s90 = sphi 0, %s76
      %s96 = sphi 0, %s98
      %s99 = sphi 0, %s96
      %s100 = sphi 0, %s99
      %s116 = sphi 0, %s100
      %s122 = sphi 0, %s124
      %s125 = sphi 0, %s122
      %s126 = sphi 0, %s125
      %s142 = sphi 0, %s126
    $region4: #{tpu_custom_call.1} parent=1 // loop_header_branch
      %21 = sbr.rel (%p19) target = $region8
    $region5: #{tpu_custom_call.1} parent=1 // loop_body
      %s23 = ssub.s32 %s18, 1
      %s24 = ssub.s32 %s18, 2
      %s25 = sadd.s32 %s18, 1
      %s26 = ssub.s32 %s18, %s25
      %p27 = scmp.eq.s32.totalorder %s26, 0
      %s29 = sadd.s32 %s28, 1
      %s30 = scalar_select %p27, %s28, %s29
      %p33 = pneg %p27
      %p34 = scmp.eq.s32.totalorder %s18, 1
      %p35 = por %p33, %p34
      %p36 = scmp.ne.s32.totalorder %s28, %s31
      %p37 = scmp.eq.s32.totalorder %s18, 0
      %p38 = por %p36, %p37
      %p39 = scmp.ne.s32.totalorder %s28, %s31
      %p40 = scmp.eq.s32.totalorder %s23, 1
      %p41 = por %p39, %p40
      %p42 = scmp.ne.s32.totalorder %s31, %s32
      %p43 = scmp.eq.s32.totalorder %s23, 0
      %p44 = por %p42, %p43
      %p45 = scmp.ne.s32.totalorder %s31, %s32
      %p46 = scmp.eq.s32.totalorder %s24, 1
      %p47 = por %p45, %p46
      %p49 = scmp.ne.s32.totalorder %s32, %s48
      %p50 = scmp.eq.s32.totalorder %s24, 0
      %p51 = por %p49, %p50
      %s53 = sadd.s32 %s52, 1
      %p56 = scmp.eq.s32.totalorder %s18, 1
      %p57 = scmp.ne.s32.totalorder %s52, %s54
      %p58 = scmp.eq.s32.totalorder %s18, 0
      %p59 = por %p57, %p58
      %p60 = scmp.ne.s32.totalorder %s52, %s54
      %p61 = scmp.eq.s32.totalorder %s23, 1
      %p62 = por %p60, %p61
      %p63 = scmp.ne.s32.totalorder %s54, %s55
      %p64 = scmp.eq.s32.totalorder %s23, 0
      %p65 = por %p63, %p64
      %p66 = scmp.ne.s32.totalorder %s54, %s55
      %p67 = scmp.eq.s32.totalorder %s24, 1
      %p68 = por %p66, %p67
      %p70 = scmp.ne.s32.totalorder %s55, %s69
      %p71 = scmp.eq.s32.totalorder %s24, 0
      %p72 = por %p70, %p71
      %s74 = sadd.s32 %s73, 1
      %p77 = scmp.eq.s32.totalorder %s18, 1
      %p78 = scmp.ne.s32.totalorder %s73, %s75
      %p79 = scmp.eq.s32.totalorder %s18, 0
      %p80 = por %p78, %p79
      %p81 = scmp.ne.s32.totalorder %s73, %s75
      %p82 = scmp.eq.s32.totalorder %s23, 1
      %p83 = por %p81, %p82
      %p84 = scmp.ne.s32.totalorder %s75, %s76
      %p85 = scmp.eq.s32.totalorder %s23, 0
      %p86 = por %p84, %p85
      %p87 = scmp.ne.s32.totalorder %s75, %s76
      %p88 = scmp.eq.s32.totalorder %s24, 1
      %p89 = por %p87, %p88
      %p91 = scmp.ne.s32.totalorder %s76, %s90
      %p92 = scmp.eq.s32.totalorder %s24, 0
      %p93 = por %p91, %p92
      %s94 = ssub.s32 %s18, %s25
      %p95 = scmp.eq.s32.totalorder %s94, 0
      %s97 = sadd.s32 %s96, 1
      %s98 = scalar_select %p95, %s96, %s97
      %p101 = pneg %p95
      %p102 = scmp.eq.s32.totalorder %s18, 1
      %p103 = por %p101, %p102
      %p104 = scmp.ne.s32.totalorder %s96, %s99
      %p105 = scmp.eq.s32.totalorder %s18, 0
      %p106 = por %p104, %p105
      %p107 = scmp.ne.s32.totalorder %s96, %s99
      %p108 = scmp.eq.s32.totalorder %s23, 1
      %p109 = por %p107, %p108
      %p110 = scmp.ne.s32.totalorder %s99, %s100
      %p111 = scmp.eq.s32.totalorder %s23, 0
      %p112 = por %p110, %p111
      %p113 = scmp.ne.s32.totalorder %s99, %s100
      %p114 = scmp.eq.s32.totalorder %s24, 1
      %p115 = por %p113, %p114
      %p117 = scmp.ne.s32.totalorder %s100, %s116
      %p118 = scmp.eq.s32.totalorder %s24, 0
      %p119 = por %p117, %p118
      %s120 = ssub.s32 %s18, %s25
      %p121 = scmp.eq.s32.totalorder %s120, 0
      %s123 = sadd.s32 %s122, 1
      %s124 = scalar_select %p121, %s122, %s123
      %p127 = pneg %p121
      %p128 = scmp.eq.s32.totalorder %s18, 1
      %p129 = por %p127, %p128
      %p130 = scmp.ne.s32.totalorder %s122, %s125
      %p131 = scmp.eq.s32.totalorder %s18, 0
      %p132 = por %p130, %p131
      %p133 = scmp.ne.s32.totalorder %s122, %s125
      %p134 = scmp.eq.s32.totalorder %s23, 1
      %p135 = por %p133, %p134
      %p136 = scmp.ne.s32.totalorder %s125, %s126
      %p137 = scmp.eq.s32.totalorder %s23, 0
      %p138 = por %p136, %p137
      %p139 = scmp.ne.s32.totalorder %s125, %s126
      %p140 = scmp.eq.s32.totalorder %s24, 1
      %p141 = por %p139, %p140
      %p143 = scmp.ne.s32.totalorder %s126, %s142
      %p144 = scmp.eq.s32.totalorder %s24, 0
      %p145 = por %p143, %p144
      %p146 = scmp.le.s32.totalorder 1, %s18
      %p147 = scmp.lt.s32.totalorder %s18, 3
      %p148 = pnand %p146, %p147
      %p149 = pneg %p148
      // Predicated region
      $region9: #{tpu_custom_call.1} parent=5 // pred_check
        _
      $region10: #{tpu_custom_call.1} parent=5 // pred_check_branch
        %151 = sbr.rel (%p148) target = $region12
      $region11: #{tpu_custom_call.1} parent=5 // pred_region
        %s152 = ssub.s32 %s18, 1
        // Predicated region
        $region13: #{tpu_custom_call.1} parent=11 // pred_check
          %p153 = pneg %p65
        $region14: #{tpu_custom_call.1} parent=11 // pred_check_branch
          %155 = sbr.rel (%p153) target = $region16
        $region15: #{tpu_custom_call.1} parent=11 // pred_region
          %s157 = ssub.s32 128, 128
          %158 = vsyncadd [#allocation7], %s157
          %s160 = sshll.u32 [#allocation6], 4
          %s161 = int_to_ptr.vmem [resolvable:$true] %s160
          %163 = dma.hbm_to_vmem [thread:$0]  %s1, 128, %s161, [#allocation7]
        $region16: #{tpu_custom_call.1} parent=11 // pred_fallthru
          _
        // Predicated region
        $region17: #{tpu_custom_call.1} parent=11 // pred_check
          %p164 = pneg %p86
        $region18: #{tpu_custom_call.1} parent=11 // pred_check_branch
          %166 = sbr.rel (%p164) target = $region20
        $region19: #{tpu_custom_call.1} parent=11 // pred_region
          %s168 = ssub.s32 512, 512
          %169 = vsyncadd [#allocation7], %s168
          %s170 = sshll.u32 [#allocation8], 4
          %s171 = int_to_ptr.vmem [resolvable:$true] %s170
          %176 = dma.hbm_to_vmem [thread:$0]  %s2, 512, %s171, [#allocation7], 256, 256, 16
        $region20: #{tpu_custom_call.1} parent=11 // pred_fallthru
          _
      $region12: #{tpu_custom_call.1} parent=5 // pred_fallthru
        _
      %p177 = scmp.lt.s32.totalorder %s18, 2
      // Predicated region
      $region21: #{tpu_custom_call.1} parent=5 // pred_check
        %p178 = pneg %p177
      $region22: #{tpu_custom_call.1} parent=5 // pred_check_branch
        %180 = sbr.rel (%p178) target = $region24
      $region23: #{tpu_custom_call.1} parent=5 // pred_region
        // Predicated region
        $region25: #{tpu_custom_call.1} parent=23 // pred_check
          %p181 = pneg %p38
        $region26: #{tpu_custom_call.1} parent=23 // pred_check_branch
          %183 = sbr.rel (%p181) target = $region28
        $region27: #{tpu_custom_call.1} parent=23 // pred_region
          %s184 = sand.u32 %s28, 1
          %s185 = scalar_lea.sflag [#allocation4], %s184
          %s186 = sand.u32 %s28, 1
          %s187 = smul.addr %s186, 8
          %s188 = scalar_lea.vmem [#allocation3], %s187
          %s190 = ssub.s32 128, 128
          %191 = vsyncadd %s185, %s190
          %s192 = smul.addr %s18, 2
          %s193 = smul.addr %s192, 64
          %s194 = scalar_lea.hbm %s0, %s193
          %s196 = sshll.u32 %s188, 4
          %s197 = int_to_ptr.vmem [resolvable:$true] %s196
          %199 = dma.hbm_to_vmem [thread:$0]  %s194, 128, %s197, %s185
        $region28: #{tpu_custom_call.1} parent=23 // pred_fallthru
          _
      $region24: #{tpu_custom_call.1} parent=5 // pred_fallthru
        _
      %p200 = scmp.le.s32.totalorder 1, %s18
      %p201 = scmp.lt.s32.totalorder %s18, 3
      %p202 = pnand %p200, %p201
      %p203 = pneg %p202
      // Predicated region
      $region29: #{tpu_custom_call.1} parent=5 // pred_check
        _
      $region30: #{tpu_custom_call.1} parent=5 // pred_check_branch
        %205 = sbr.rel (%p202) target = $region32
      $region31: #{tpu_custom_call.1} parent=5 // pred_region
        %s206 = ssub.s32 %s18, 1
        %s207 = sand.u32 %s31, 1
        %s208 = scalar_lea.sflag [#allocation4], %s207
        %s209 = sand.u32 %s31, 1
        %s210 = smul.addr %s209, 8
        %s211 = scalar_lea.vmem [#allocation3], %s210
        // Predicated region
        $region33: #{tpu_custom_call.1} parent=31 // pred_check
          %p212 = pneg %p44
        $region34: #{tpu_custom_call.1} parent=31 // pred_check_branch
          %214 = sbr.rel (%p212) target = $region36
        $region35: #{tpu_custom_call.1} parent=31 // pred_region
          %215 = dma.done %s208, 128
        $region36: #{tpu_custom_call.1} parent=31 // pred_fallthru
          _
        // Predicated region
        $region37: #{tpu_custom_call.1} parent=31 // pred_check
          %p216 = pneg %p65
        $region38: #{tpu_custom_call.1} parent=31 // pred_check_branch
          %218 = sbr.rel (%p216) target = $region40
        $region39: #{tpu_custom_call.1} parent=31 // pred_region
          %219 = dma.done [#allocation7], 128
        $region40: #{tpu_custom_call.1} parent=31 // pred_fallthru
          _
        // Predicated region
        $region41: #{tpu_custom_call.1} parent=31 // pred_check
          %p220 = pneg %p86
        $region42: #{tpu_custom_call.1} parent=31 // pred_check_branch
          %222 = sbr.rel (%p220) target = $region44
        $region43: #{tpu_custom_call.1} parent=31 // pred_region
          %223 = dma.done [#allocation7], 512
        $region44: #{tpu_custom_call.1} parent=31 // pred_fallthru
          _
        %s224 = sand.u32 %s31, 1
        %s225 = scalar_lea.sflag [#allocation4], %s224
        %s226 = sand.u32 %s31, 1
        %s227 = smul.addr %s226, 8
        %s228 = scalar_lea.vmem [#allocation3], %s227
        %p229 = pneg %p44
        %p230 = pneg %p41
        %p231 = pneg %p65
        %p232 = pneg %p62
        %p233 = pneg %p86
        %p234 = pneg %p83
        %p235 = pneg %p112
        %p236 = pneg %p109
        %s237 = sand.u32 %s99, 1
        %s238 = scalar_lea.sflag [#allocation5], %s237
        %s239 = sand.u32 %s99, 1
        %s240 = smul.addr %s239, 16
        %s241 = scalar_lea.vmem [#allocation9], %s240
        %p242 = pneg %p138
        %p243 = pneg %p135
        %p244 = scmp.lt.s32.totalorder %s23, 1
        %s245 = scalar_select %p244, %s23, 1
        %s246 = smul.addr %s245, 8
        %s247 = scalar_lea.vmem %s4, %s246
        %p248 = scmp.lt.s32.totalorder %s23, 1
        %s249 = scalar_select %p248, %s23, 1
        %s250 = smul.addr %s249, 8
        %s251 = scalar_lea.vmem %s4, %s250
        %v252 = vld [vmem:[%s211] sm:$0xff]
        %v254 = vcombine.high %v252, %v252
        %256 = vrot.lane.b32.xlu0 %v252, 17
        %v257 = vpop.permute.xlu0 %256
        %258 = vrot.lane.b32.xlu0 %v254, 17
        %v259 = vpop.permute.xlu0 %258
        %v260 = vlaneseq
        %v261 = vand.u32 %v260, 127
        %vm262 = vcmp.lt.s32.totalorder %v261, 17
        %v263 = vsel %vm262, %v257, %v259
        %v264 = vsel %vm262, %v259, %v257
        %v265 = vld [vmem:[#allocation8] ss:$8 sm:$0x3]
        %v267 = vlaneseq
        %v268 = vshrl.u32 %v267, 7
        %v269 = vsub.s32 0, %v268
        %v270 = vrot.slane %v265, %v269
        %v271 = vlaneseq
        %v272 = vshrl.u32 %v271, 7
        %v273 = vsub.s32 1, %v272
        %v274 = vrot.slane %v265, %v273
        %v277 = vmul.f32 %v264, %v270
        %v278 = vmul.f32 %v263, %v274
        %279 = vst [vmem:[#allocation2] sm:$0xf] %v277
        %280 = vst [vmem:[#allocation2 + $0x8] sm:$0xf] %v278
        %281 = vrot.lane.b32.xlu0 %v252, 16
        %v282 = vpop.permute.xlu0 %281
        %283 = vrot.lane.b32.xlu0 %v254, 16
        %v284 = vpop.permute.xlu0 %283
        %vm285 = vcmp.lt.s32.totalorder %v261, 16
        %v286 = vsel %vm285, %v282, %v284
        %v287 = vsel %vm285, %v284, %v282
        %s288 = scalar_lea.vmem [#allocation8], 1
        %v289 = vld [vmem:[%s288] ss:$8 sm:$0x3]
        %v291 = vlaneseq
        %v292 = vshrl.u32 %v291, 7
        %v293 = vsub.s32 0, %v292
        %v294 = vrot.slane %v289, %v293
        %v295 = vlaneseq
        %v296 = vshrl.u32 %v295, 7
        %v297 = vsub.s32 1, %v296
        %v298 = vrot.slane %v289, %v297
        %v301 = vmul.f32 %v287, %v294
        %v302 = vmul.f32 %v286, %v298
        %v305 = vrot.slane %v301, 4
        %v306 = vrot.slane %v302, 4
        %309 = vst [vmem:[#allocation2] sm:$0xf0] %v305
        %310 = vst [vmem:[#allocation2 + $0x8] sm:$0xf0] %v306
        %311 = vrot.lane.b32.xlu0 %v252, 15
        %v312 = vpop.permute.xlu0 %311
        %313 = vrot.lane.b32.xlu0 %v254, 15
        %v314 = vpop.permute.xlu0 %313
        %vm315 = vcmp.lt.s32.totalorder %v261, 15
        %v316 = vsel %vm315, %v312, %v314
        %v317 = vsel %vm315, %v314, %v312
        %s318 = scalar_lea.vmem [#allocation8], 2
        %v319 = vld [vmem:[%s318] ss:$8 sm:$0x3]
        %v321 = vlaneseq
        %v322 = vshrl.u32 %v321, 7
        %v323 = vsub.s32 0, %v322
        %v324 = vrot.slane %v319, %v323
        %v325 = vlaneseq
        %v326 = vshrl.u32 %v325, 7
        %v327 = vsub.s32 1, %v326
        %v328 = vrot.slane %v319, %v327
        %v331 = vmul.f32 %v317, %v324
        %v332 = vmul.f32 %v316, %v328
        %333 = vst [vmem:[#allocation2 + $0x10] sm:$0xf] %v331
        %334 = vst [vmem:[#allocation2 + $0x18] sm:$0xf] %v332
        %335 = vrot.lane.b32.xlu0 %v252, 1
        %v336 = vpop.permute.xlu0 %335
        %337 = vrot.lane.b32.xlu0 %v254, 1
        %v338 = vpop.permute.xlu0 %337
        %vm339 = vcmp.lt.s32.totalorder %v261, 1
        %v340 = vsel %vm339, %v336, %v338
        %v341 = vsel %vm339, %v338, %v336
        %s342 = scalar_lea.vmem [#allocation8], 3
        %v343 = vld [vmem:[%s342] ss:$8 sm:$0x3]
        %v345 = vlaneseq
        %v346 = vshrl.u32 %v345, 7
        %v347 = vsub.s32 0, %v346
        %v348 = vrot.slane %v343, %v347
        %v349 = vlaneseq
        %v350 = vshrl.u32 %v349, 7
        %v351 = vsub.s32 1, %v350
        %v352 = vrot.slane %v343, %v351
        %v355 = vmul.f32 %v341, %v348
        %v356 = vmul.f32 %v340, %v352
        %v359 = vrot.slane %v355, 4
        %v360 = vrot.slane %v356, 4
        %363 = vst [vmem:[#allocation2 + $0x10] sm:$0xf0] %v359
        %364 = vst [vmem:[#allocation2 + $0x18] sm:$0xf0] %v360
        %s365 = scalar_lea.vmem [#allocation8], 4
        %v366 = vld [vmem:[%s365] ss:$8 sm:$0x3]
        %v368 = vlaneseq
        %v369 = vshrl.u32 %v368, 7
        %v370 = vsub.s32 0, %v369
        %v371 = vrot.slane %v366, %v370
        %v372 = vlaneseq
        %v373 = vshrl.u32 %v372, 7
        %v374 = vsub.s32 1, %v373
        %v375 = vrot.slane %v366, %v374
        %v376 = vcombine.low %v371, %v375
        %v378 = vmul.f32 %v252, %v376
        %v380 = vcombine.high %v378, %v378
        %382 = vst [vmem:[#allocation2 + $0x20] sm:$0xf] %v378
        %383 = vst [vmem:[#allocation2 + $0x28] sm:$0xf] %v380
        %384 = vrot.lane.b32.xlu0 %v252, 127
        %v385 = vpop.permute.xlu0 %384
        %386 = vrot.lane.b32.xlu0 %v254, 127
        %v387 = vpop.permute.xlu0 %386
        %vm388 = vcmp.lt.s32.totalorder %v261, 127
        %v389 = vsel %vm388, %v385, %v387
        %v390 = vsel %vm388, %v387, %v385
        %s391 = scalar_lea.vmem [#allocation8], 5
        %v392 = vld [vmem:[%s391] ss:$8 sm:$0x3]
        %v394 = vlaneseq
        %v395 = vshrl.u32 %v394, 7
        %v396 = vsub.s32 0, %v395
        %v397 = vrot.slane %v392, %v396
        %v398 = vlaneseq
        %v399 = vshrl.u32 %v398, 7
        %v400 = vsub.s32 1, %v399
        %v401 = vrot.slane %v392, %v400
        %v404 = vmul.f32 %v389, %v397
        %v405 = vmul.f32 %v390, %v401
        %v408 = vrot.slane %v404, 4
        %v409 = vrot.slane %v405, 4
        %412 = vst [vmem:[#allocation2 + $0x20] sm:$0xf0] %v408
        %413 = vst [vmem:[#allocation2 + $0x28] sm:$0xf0] %v409
        %414 = vrot.lane.b32.xlu0 %v252, 113
        %v415 = vpop.permute.xlu0 %414
        %416 = vrot.lane.b32.xlu0 %v254, 113
        %v417 = vpop.permute.xlu0 %416
        %vm418 = vcmp.lt.s32.totalorder %v261, 113
        %v419 = vsel %vm418, %v415, %v417
        %v420 = vsel %vm418, %v417, %v415
        %s421 = scalar_lea.vmem [#allocation8], 6
        %v422 = vld [vmem:[%s421] ss:$8 sm:$0x3]
        %v424 = vlaneseq
        %v425 = vshrl.u32 %v424, 7
        %v426 = vsub.s32 0, %v425
        %v427 = vrot.slane %v422, %v426
        %v428 = vlaneseq
        %v429 = vshrl.u32 %v428, 7
        %v430 = vsub.s32 1, %v429
        %v431 = vrot.slane %v422, %v430
        %v434 = vmul.f32 %v419, %v427
        %v435 = vmul.f32 %v420, %v431
        %436 = vst [vmem:[#allocation2 + $0x30] sm:$0xf] %v434
        %437 = vst [vmem:[#allocation2 + $0x38] sm:$0xf] %v435
        %438 = vrot.lane.b32.xlu0 %v252, 112
        %v439 = vpop.permute.xlu0 %438
        %440 = vrot.lane.b32.xlu0 %v254, 112
        %v441 = vpop.permute.xlu0 %440
        %vm442 = vcmp.lt.s32.totalorder %v261, 112
        %v443 = vsel %vm442, %v439, %v441
        %v444 = vsel %vm442, %v441, %v439
        %s445 = scalar_lea.vmem [#allocation8], 7
        %v446 = vld [vmem:[%s445] ss:$8 sm:$0x3]
        %v448 = vlaneseq
        %v449 = vshrl.u32 %v448, 7
        %v450 = vsub.s32 0, %v449
        %v451 = vrot.slane %v446, %v450
        %v452 = vlaneseq
        %v453 = vshrl.u32 %v452, 7
        %v454 = vsub.s32 1, %v453
        %v455 = vrot.slane %v446, %v454
        %v458 = vmul.f32 %v443, %v451
        %v459 = vmul.f32 %v444, %v455
        %v462 = vrot.slane %v458, 4
        %v463 = vrot.slane %v459, 4
        %466 = vst [vmem:[#allocation2 + $0x30] sm:$0xf0] %v462
        %467 = vst [vmem:[#allocation2 + $0x38] sm:$0xf0] %v463
        %468 = vrot.lane.b32.xlu0 %v252, 111
        %v469 = vpop.permute.xlu0 %468
        %470 = vrot.lane.b32.xlu0 %v254, 111
        %v471 = vpop.permute.xlu0 %470
        %vm472 = vcmp.lt.s32.totalorder %v261, 111
        %v473 = vsel %vm472, %v469, %v471
        %v474 = vsel %vm472, %v471, %v469
        %s475 = scalar_lea.vmem [#allocation8], 16
        %v476 = vld [vmem:[%s475] ss:$8 sm:$0x3]
        %v478 = vlaneseq
        %v479 = vshrl.u32 %v478, 7
        %v480 = vsub.s32 0, %v479
        %v481 = vrot.slane %v476, %v480
        %v482 = vlaneseq
        %v483 = vshrl.u32 %v482, 7
        %v484 = vsub.s32 1, %v483
        %v485 = vrot.slane %v476, %v484
        %v488 = vmul.f32 %v473, %v481
        %v489 = vmul.f32 %v474, %v485
        %490 = vst [vmem:[#allocation2 + $0x40] sm:$0xf] %v488
        %491 = vst [vmem:[#allocation2 + $0x48] sm:$0xf] %v489
        %v492 = vld [vmem:[#allocation6] sm:$0xff]
        %v493 = vld [vmem:[#allocation2] sm:$0xff]
        %v494 = vld [vmem:[#allocation2 + $0x8] sm:$0xff]
        %v495 = vld [vmem:[#allocation2 + $0x10] sm:$0xff]
        %v496 = vld [vmem:[#allocation2 + $0x18] sm:$0xff]
        %v497 = vld [vmem:[#allocation2 + $0x20] sm:$0xff]
        %v498 = vld [vmem:[#allocation2 + $0x28] sm:$0xff]
        %v499 = vld [vmem:[#allocation2 + $0x30] sm:$0xff]
        %v500 = vld [vmem:[#allocation2 + $0x38] sm:$0xff]
        %v501 = vld [vmem:[#allocation2 + $0x40] sm:$0xf]
        %v502 = vld [vmem:[#allocation2 + $0x48] sm:$0xf]
        %vm503 = vcmask 293888
        %v505 = vsel %vm503, %v492, 0
        %vm507 = vcmask 1043456
        %v509 = vsel %vm507, %v501, 0
        %v512 = vsel %vm507, %v502, 0
        %514 = vmatprep.subr.mxu0 %v494
        %515 = vmatpush1.msra.mxu0 %v493
        %516 = vmatprep.subr.mxu0 %v496
        %517 = vmatpush1.msra.mxu0 %v495
        %518 = vmatprep.subr.mxu0 %v498
        %519 = vmatpush1.msra.mxu0 %v497
        %520 = vmatprep.subr.mxu0 %v500
        %521 = vmatpush1.msra.mxu0 %v499
        %522 = vmatprep.subr.mxu0 %v512
        %523 = vmatpush1.msra.mxu0 %v509
        %524 = vmatprep.subr.mxu0 0.0
        %525 = vmatpush1.msra.mxu0 0.0
        %526 = vmatprep.subr.mxu0 0.0
        %527 = vmatpush1.msra.mxu0 0.0
        %528 = vmatprep.subr.mxu0 0.0
        %529 = vmatpush1.msra.mxu0 0.0
        %530 = vmatprep.subr.mxu0 0.0
        %531 = vmatpush1.msra.mxu0 0.0
        %532 = vmatprep.subr.mxu0 0.0
        %533 = vmatpush1.msra.mxu0 0.0
        %534 = vmatprep.subr.mxu0 0.0
        %535 = vmatpush1.msra.mxu0 0.0
        %536 = vmatprep.subr.mxu0 0.0
        %537 = vmatpush1.msra.mxu0 0.0
        %538 = vmatprep.subr.mxu0 0.0
        %539 = vmatpush1.msra.mxu0 0.0
        %540 = vmatprep.subr.mxu0 0.0
        %541 = vmatpush1.msra.mxu0 0.0
        %542 = vmatprep.subr.mxu0 0.0
        %543 = vmatpush1.msra.mxu0 0.0
        %544 = vmatprep.subr.mxu0 0.0
        %545 = vmatpush1.msra.mxu0 0.0
        %546 = vmatprep.subr.mxu0 0.0
        %547 = vmatpush1.msra.mxu0 0.0
        %548 = vmatprep.subr.mxu0 0.0
        %549 = vmatpush1.msra.mxu0 0.0
        %550 = vmatprep.subr.mxu0 0.0
        %551 = vmatpush1.msra.mxu0 0.0
        %552 = vmatprep.subr.mxu0 0.0
        %553 = vmatpush1.msra.mxu0 0.0
        %554 = vmatprep.subr.mxu0 0.0
        %555 = vmatpush1.msra.mxu0 0.0
        %556 = vmatprep.subr.mxu0 0.0
        %557 = vmatpush1.msra.mxu0 0.0
        %558 = vmatprep.subr.mxu0 0.0
        %559 = vmatpush1.msra.mxu0 0.0
        %560 = vmatprep.subr.mxu0 0.0
        %561 = vmatpush1.msra.mxu0 0.0
        %562 = vmatprep.subr.mxu0 0.0
        %563 = vmatpush1.msra.mxu0 0.0
        %564 = vmatprep.subr.mxu0 0.0
        %565 = vmatpush1.msra.mxu0 0.0
        %566 = vmatprep.subr.mxu0 0.0
        %567 = vmatpush1.msra.mxu0 0.0
        %568 = vmatprep.subr.mxu0 0.0
        %569 = vmatpush1.msra.mxu0 0.0
        %570 = vmatprep.subr.mxu0 0.0
        %571 = vmatpush1.msra.mxu0 0.0
        %572 = vmatprep.subr.mxu0 0.0
        %573 = vmatpush1.msra.mxu0 0.0
        %574 = vmatprep.subr.mxu0 0.0
        %575 = vmatpush1.msra.mxu0 0.0
        %576 = vmatprep.subr.mxu0 0.0
        %577 = vmatpush1.msra.mxu0 0.0
        %578 = vmatprep.mubr.f32.mxu0 0.0
        %579 = vmatmul.mubr.f32.gmra.mrb[0].mxu0 %v505
        %v580 = vpop.f32.mrb[0].mxu0
        %v581 = vadd.f32 0.0, %v580
        %v582 = vpop.f32.mrb[0].mxu0
        %v583 = vadd.f32 0.0, %v582
        %584 = vdwg.mxu0
        %585 = vst [vmem:[%s241] sm:$0xff] %v581
        %586 = vst [vmem:[%s241 + $0x8] sm:$0xff] %v583
        %v587 = vadd.f32 %v581, %v583
        %588 = vadd.xlane.f32.xlu0 %v587
        %v589 = vpop.xlane.xlu0 %588
        %vm590 = vcmask 7168
        %591 = vst.msk [vmem:[%s251] sm:$0xff] %vm590, %v589
        %v592 = vmul.f32 %v581, %v581
        %v593 = vmul.f32 %v583, %v583
        %v594 = vadd.f32 %v592, %v593
        %595 = vadd.xlane.f32.xlu0 %v594
        %v596 = vpop.xlane.xlu0 %595
        %vm597 = vcmask 15368
        %598 = vst.msk [vmem:[%s251] sm:$0xff] %vm597, %v596
        %s599 = sand.u32 %s99, 1
        %s600 = scalar_lea.sflag [#allocation5], %s599
        %s601 = sand.u32 %s99, 1
        %s602 = smul.addr %s601, 16
        %s603 = scalar_lea.vmem [#allocation9], %s602
        %p604 = scmp.lt.s32.totalorder %s23, 1
        %s605 = scalar_select %p604, %s23, 1
        %s606 = smul.addr %s605, 8
        %s607 = scalar_lea.vmem %s4, %s606
        // Predicated region
        $region45: #{tpu_custom_call.1} parent=31 // pred_check
          %p608 = pneg %p109
        $region46: #{tpu_custom_call.1} parent=31 // pred_check_branch
          %610 = sbr.rel (%p608) target = $region48
        $region47: #{tpu_custom_call.1} parent=31 // pred_region
          %s612 = ssub.s32 256, 256
          %613 = vsyncadd %s600, %s612
          %s614 = smul.addr %s23, 2
          %s615 = smul.addr %s614, 128
          %s616 = scalar_lea.hbm %s3, %s615
          %s618 = sshll.u32 %s603, 4
          %s619 = int_to_ptr.vmem [resolvable:$true] %s618
          %621 = dma.vmem_to_hbm [thread:$0]  %s619, 256, %s616, %s600
        $region48: #{tpu_custom_call.1} parent=31 // pred_fallthru
          _
        // Predicated region
        $region49: #{tpu_custom_call.1} parent=31 // pred_check
          %p622 = pneg %p135
        $region50: #{tpu_custom_call.1} parent=31 // pred_check_branch
          %624 = sbr.rel (%p622) target = $region52
        $region51: #{tpu_custom_call.1} parent=31 // pred_region
          _
        $region52: #{tpu_custom_call.1} parent=31 // pred_fallthru
          _
      $region32: #{tpu_custom_call.1} parent=5 // pred_fallthru
        _
      %p625 = scmp.le.s32.totalorder 2, %s18
      // Predicated region
      $region53: #{tpu_custom_call.1} parent=5 // pred_check
        %p626 = pneg %p625
      $region54: #{tpu_custom_call.1} parent=5 // pred_check_branch
        %628 = sbr.rel (%p626) target = $region56
      $region55: #{tpu_custom_call.1} parent=5 // pred_region
        %s629 = ssub.s32 %s18, 2
        // Predicated region
        $region57: #{tpu_custom_call.1} parent=55 // pred_check
          %p630 = pneg %p115
        $region58: #{tpu_custom_call.1} parent=55 // pred_check_branch
          %632 = sbr.rel (%p630) target = $region60
        $region59: #{tpu_custom_call.1} parent=55 // pred_region
          %s633 = sand.u32 %s100, 1
          %s634 = scalar_lea.sflag [#allocation5], %s633
          %s635 = sand.u32 %s100, 1
          %s636 = smul.addr %s635, 16
          %s637 = scalar_lea.vmem [#allocation9], %s636
          %638 = dma.done %s634, 256
        $region60: #{tpu_custom_call.1} parent=55 // pred_fallthru
          _
        // Predicated region
        $region61: #{tpu_custom_call.1} parent=55 // pred_check
          %p639 = pneg %p141
        $region62: #{tpu_custom_call.1} parent=55 // pred_check_branch
          %641 = sbr.rel (%p639) target = $region64
        $region63: #{tpu_custom_call.1} parent=55 // pred_region
          %p642 = scmp.lt.s32.totalorder %s24, 1
          %s643 = scalar_select %p642, %s24, 1
          %s644 = smul.addr %s643, 8
          %s645 = scalar_lea.vmem %s4, %s644
        $region64: #{tpu_custom_call.1} parent=55 // pred_fallthru
          _
      $region56: #{tpu_custom_call.1} parent=5 // pred_fallthru
        _
    $region6: #{tpu_custom_call.1} parent=1 // loop_footer
      %s22 = sadd.s32 1, %s18
    $region7: #{tpu_custom_call.1} parent=1 // loop_footer_branch
      %17 = sbr.rel target = $region3
    $region8: #{tpu_custom_call.1} parent=1 // loop_exit
      _
    %646 = vsyncpa [#allocation4], 1
    %s647 = scalar_lea.sflag [#allocation4], 1
    %648 = vsyncpa %s647, 1
    %649 = vsyncpa [#allocation7], 1
    %650 = vsyncpa [#allocation5], 1
    %s651 = scalar_lea.sflag [#allocation5], 1
    %652 = vsyncpa %s651, 1

</llo_original>
